<compile_context>
chip_gen: v7x
topology: tpu7x:2x2x1
jax: 0.10.0
libtpu: 0.0.40
codegen_flags: <defaults>
</compile_context>

<pallas_src>
import functools

import jax
import jax.numpy as jnp
from jax.experimental import pallas as pl
from jax.experimental.pallas import tpu as pltpu


# ----------------------------------------------------------------------------
# Kernels
# ----------------------------------------------------------------------------
def _fused_kernel(x_ref, beta_ref, gamma_ref, o_ref, *, n_elems, eps):
    """Single-pass path: whole (R, L) sample resident in VMEM."""
    x = x_ref[...].astype(jnp.float32)                      # (R, L)
    s = jnp.sum(x)
    sq = jnp.sum(x * x)
    mean = s * (1.0 / n_elems)
    # Unbiased variance (torch.var default): divide by n-1.  Clamp guards
    # cancellation in sumsq - n*mean^2 (f32 accumulation).
    var = jnp.maximum(sq - s * mean, 0.0) * (1.0 / max(n_elems - 1, 1))

    beta_v = beta_ref[...].astype(jnp.float32)              # (R, 1)
    gamma_v = gamma_ref[...].astype(jnp.float32)            # (R, 1)
    inv_std = jax.lax.rsqrt(jnp.full_like(beta_v, var) + eps)   # EUP rsqrt
    scale = beta_v * inv_std
    shift = gamma_v - mean * scale
    o_ref[...] = (x * scale + shift).astype(o_ref.dtype)


def _stats_kernel(x_ref, beta_ref, gamma_ref, scale_ref, shift_ref,
                  sum_ref, sq_ref, *, n_elems, eps):
    """Streaming pass 1: per-row partial sums over lane tiles of one sample;
    on the last tile finalize the per-row affine (scale, shift)."""
    t = pl.program_id(1)

    @pl.when(t == 0)
    def _init():
        sum_ref[...] = jnp.zeros_like(sum_ref)
        sq_ref[...] = jnp.zeros_like(sq_ref)

    x = x_ref[...].astype(jnp.float32)                      # (R, T_L)
    # Lane-only reduce per tile (XLU); sublane axis stays vectorized.
    # Zero padding of the lane axis contributes 0 to both accumulators.
    sum_ref[...] += jnp.sum(x, axis=1, keepdims=True)
    sq_ref[...] += jnp.sum(x * x, axis=1, keepdims=True)

    @pl.when(t == pl.num_programs(1) - 1)
    def _finalize():
        s = jnp.sum(sum_ref[...])
        sq = jnp.sum(sq_ref[...])
        mean = s * (1.0 / n_elems)
        var = jnp.maximum(sq - s * mean, 0.0) * (1.0 / max(n_elems - 1, 1))

        beta_v = beta_ref[...].astype(jnp.float32)          # (R, 1)
        gamma_v = gamma_ref[...].astype(jnp.float32)        # (R, 1)
        inv_std = jax.lax.rsqrt(jnp.full_like(beta_v, var) + eps)
        scale = beta_v * inv_std
        scale_ref[...] = scale
        shift_ref[...] = gamma_v - mean * scale


def _norm_kernel(x_ref, scale_ref, shift_ref, o_ref):
    """Streaming pass 2: out = x * scale + shift (one mul + one add / elem)."""
    x = x_ref[...].astype(jnp.float32)                      # (R, T_L)
    o_ref[...] = (x * scale_ref[...] + shift_ref[...]).astype(o_ref.dtype)


# ----------------------------------------------------------------------------
# Tiling heuristics (wrapper-side layout plumbing only)
# ----------------------------------------------------------------------------
def _choose_h_split(C, H, W):
    """Smallest divisor h of H with C*h >= 8 sublanes, keeping >=128 lanes."""
    best = 1
    for h in range(1, H + 1):
        if H % h != 0:
            continue
        if h > 1 and (H // h) * W < 128 and H * W >= 128:
            break
        best = h
        if C * h >= 8:
            break
    return best


def _choose_lane_tiling(L, R, itemsize, max_tile_lanes):
    """Lane tile for streaming: multiple of 128 (or full L), ~<=2 MiB/buffer.
    Prefers a tile size that divides L exactly so no padding is needed."""
    max_tile_lanes = max(128, (max_tile_lanes // 128) * 128)
    max_lanes_bytes = (2 << 20) // max(R * itemsize, 1)
    max_lanes = max(128, min(max_tile_lanes, (max_lanes_bytes // 128) * 128))
    if L <= max_lanes:
        return L, 1, L                       # single full-width tile, no pad
    for t in range(max_lanes, 127, -128):    # divisor tile -> no padding
        if L % t == 0:
            return t, L // t, L
    num_tiles = -(-L // max_lanes)           # even split, rounded to 128
    t_l = -(-L // (num_tiles * 128)) * 128
    return t_l, num_tiles, num_tiles * t_l


# ----------------------------------------------------------------------------
# Wrapper
# ----------------------------------------------------------------------------
def glayernorm2d(x, beta, gamma, eps=1e-12, *,
                 max_resident_bytes=2 << 20, max_tile_lanes=4096):
    """x: (N, C, H, W); beta, gamma: (1, C, 1, 1). Returns (N, C, H, W)."""
    N, C, H, W = x.shape
    itemsize = jnp.dtype(x.dtype).itemsize

    # Fold part of H into the sublane axis (pure reshape, no transpose).
    h_split = _choose_h_split(C, H, W)
    R = C * h_split
    L = (H // h_split) * W
    n_elems = C * H * W

    x2 = x.reshape(N, R, L)
    # Per-row (channel-repeated) affine parameters; row r belongs to channel
    # r // h_split, so each channel's value is repeated h_split times.
    beta2 = jnp.repeat(beta.reshape(C).astype(jnp.float32), h_split).reshape(R, 1)
    gamma2 = jnp.repeat(gamma.reshape(C).astype(jnp.float32), h_split).reshape(R, 1)

    sample_f32_bytes = R * L * 4

    # ------------------------------------------------------------------
    # Fused single-pass path: whole sample resident in VMEM.
    # Block == full (R, L) dims, so the (8,128) divisibility constraint is
    # satisfied without any padding/slicing traffic in the wrapper.
    # ------------------------------------------------------------------
    if sample_f32_bytes <= max_resident_bytes:
        kern = functools.partial(_fused_kernel, n_elems=n_elems, eps=eps)
        vmem_limit = int(min(32 << 20, max(4 << 20, 12 * sample_f32_bytes)))
        total = N * R * L
        out = pl.pallas_call(
            kern,
            out_shape=jax.ShapeDtypeStruct((N, R, L), x.dtype),
            grid_spec=pltpu.PrefetchScalarGridSpec(
                num_scalar_prefetch=0,
                grid=(N,),
                in_specs=[
                    pl.BlockSpec((None, R, L), lambda n: (n, 0, 0)),
                    pl.BlockSpec((R, 1), lambda n: (0, 0)),
                    pl.BlockSpec((R, 1), lambda n: (0, 0)),
                ],
                out_specs=pl.BlockSpec((None, R, L), lambda n: (n, 0, 0)),
            ),
            compiler_params=pltpu.CompilerParams(
                dimension_semantics=("parallel",),
                vmem_limit_bytes=vmem_limit,
            ),
            cost_estimate=pl.CostEstimate(
                flops=5 * total,
                transcendentals=N * R,
                bytes_accessed=2 * total * itemsize,
            ),
        )(x2, beta2, gamma2)
        return out.reshape(N, C, H, W)

    # ------------------------------------------------------------------
    # Streaming two-pass path (large samples): tiled along the lane axis.
    # ------------------------------------------------------------------
    t_l, num_t, l_pad = _choose_lane_tiling(L, R, itemsize, max_tile_lanes)
    if l_pad != L:
        # Zero padding is stats-neutral; padded output columns sliced off below.
        x2 = jnp.pad(x2, ((0, 0), (0, 0), (0, l_pad - L)))

    total = N * R * l_pad
    block_bytes = R * t_l * itemsize
    f32_tile = R * t_l * 4
    # 2x double-buffered in + out tiles plus f32 temps, with headroom; explicit
    # so we never silently hit the 16/32 MiB scoped defaults (v5e/v6e/v7x).
    vmem_limit = int(min(32 << 20, max(4 << 20, 4 * block_bytes + 4 * f32_tile)))

    # --- pass 1: per-sample statistics -> per-row (scale, shift) ----------
    stats_kernel = functools.partial(_stats_kernel, n_elems=n_elems, eps=eps)
    scale, shift = pl.pallas_call(
        stats_kernel,
        out_shape=(jax.ShapeDtypeStruct((N, R, 1), jnp.float32),
                   jax.ShapeDtypeStruct((N, R, 1), jnp.float32)),
        grid_spec=pltpu.PrefetchScalarGridSpec(
            num_scalar_prefetch=0,
            grid=(N, num_t),
            in_specs=[
                pl.BlockSpec((None, R, t_l), lambda n, t: (n, 0, t)),
                pl.BlockSpec((R, 1), lambda n, t: (0, 0)),
                pl.BlockSpec((R, 1), lambda n, t: (0, 0)),
            ],
            out_specs=(
                pl.BlockSpec((None, R, 1), lambda n, t: (n, 0, 0)),
                pl.BlockSpec((None, R, 1), lambda n, t: (n, 0, 0)),
            ),
            scratch_shapes=[pltpu.VMEM((R, 1), jnp.float32),
                            pltpu.VMEM((R, 1), jnp.float32)],
        ),
        compiler_params=pltpu.CompilerParams(
            dimension_semantics=("parallel", "arbitrary"),
            vmem_limit_bytes=vmem_limit,
        ),
        cost_estimate=pl.CostEstimate(
            flops=3 * total,
            transcendentals=N * R,
            bytes_accessed=total * itemsize,
        ),
    )(x2, beta2, gamma2)

    # --- pass 2: out = x * scale + shift -----------------------------------
    out = pl.pallas_call(
        _norm_kernel,
        out_shape=jax.ShapeDtypeStruct((N, R, l_pad), x.dtype),
        grid_spec=pltpu.PrefetchScalarGridSpec(
            num_scalar_prefetch=0,
            grid=(N, num_t),
            in_specs=[
                pl.BlockSpec((None, R, t_l), lambda n, t: (n, 0, t)),
                pl.BlockSpec((None, R, 1), lambda n, t: (n, 0, 0)),
                pl.BlockSpec((None, R, 1), lambda n, t: (n, 0, 0)),
            ],
            out_specs=pl.BlockSpec((None, R, t_l), lambda n, t: (n, 0, t)),
        ),
        compiler_params=pltpu.CompilerParams(
            dimension_semantics=("parallel", "parallel"),
            vmem_limit_bytes=vmem_limit,
        ),
        cost_estimate=pl.CostEstimate(
            flops=2 * total,
            transcendentals=0,
            bytes_accessed=2 * total * itemsize,
        ),
    )(x2, scale, shift)

    if l_pad != L:
        out = out[:, :, :L]
    return out.reshape(N, C, H, W)


# ----------------------------------------------------------------------------
# Reference & test
# ----------------------------------------------------------------------------
def _reference(x, beta, gamma, eps=1e-12):
    N = x.shape[0]
    flat = x.reshape(N, -1).astype(jnp.float32)
    mean = jnp.mean(flat, axis=1).reshape(N, 1, 1, 1)
    var = jnp.var(flat, axis=1, ddof=1).reshape(N, 1, 1, 1)  # unbiased, like torch.var
    return (x - mean) / jnp.sqrt(var + eps) * beta + gamma


if __name__ == "__main__":
    key = jax.random.PRNGKey(0)

    # --- demo shape (module-consistent): exercises the fused resident path ---
    N, C, H, W = 2, 4, 16, 16
    x = jax.random.normal(key, (N, C, H, W), dtype=jnp.float32)
    # Deterministic parameter init, exactly as in GLayerNorm2d.__init__:
    beta = jnp.ones((1, C, 1, 1), dtype=jnp.float32)
    gamma = jnp.zeros((1, C, 1, 1), dtype=jnp.float32)

    out = jax.block_until_ready(glayernorm2d(x, beta, gamma, eps=1e-12))
    ref = _reference(x, beta, gamma, eps=1e-12)
    assert out.shape == (N, C, H, W)
    err = jnp.max(jnp.abs(out - ref))
    assert jnp.allclose(out, ref, atol=1e-5, rtol=1e-5), f"fused max abs err {err}"

    # --- exercise the streaming two-pass path (multi lane-tile) -------------
    N2, C2, H2, W2 = 2, 8, 16, 32
    k1, k2, k3 = jax.random.split(jax.random.PRNGKey(0), 3)
    x2 = jax.random.normal(k1, (N2, C2, H2, W2), dtype=jnp.float32)
    beta2 = jax.random.normal(k2, (1, C2, 1, 1), dtype=jnp.float32)
    gamma2 = jax.random.normal(k3, (1, C2, 1, 1), dtype=jnp.float32)

    out2 = jax.block_until_ready(
        glayernorm2d(x2, beta2, gamma2, eps=1e-12,
                     max_resident_bytes=0, max_tile_lanes=128))
    ref2 = _reference(x2, beta2, gamma2, eps=1e-12)
    err2 = jnp.max(jnp.abs(out2 - ref2))
    assert jnp.allclose(out2, ref2, atol=1e-5, rtol=1e-5), f"streaming max abs err {err2}"

    print("KERNEL_OK")
</pallas_src>

<mosaic_0001>
module attributes {stable_mosaic.version = 11 : i64} {
  func.func @_fused_kernel(%arg0: i32, %arg1: memref<1x8x128xf32, #tpu.memory_space<vmem>>, %arg2: memref<8x1xf32, #tpu.memory_space<vmem>>, %arg3: memref<8x1xf32, #tpu.memory_space<vmem>>, %arg4: memref<1x8x128xf32, #tpu.memory_space<vmem>>) attributes {dimension_semantics = [#tpu.dimension_semantics<parallel>], iteration_bounds = array<i64: 2>, scalar_prefetch = 0 : i64, scratch_operands = 0 : i64, tpu.core_type = #tpu.core_type<tc>, window_params = [{transform_indices = @transform_0, window_bounds = array<i64: 1, 8, 128>}, {pipeline_mode = #tpu.pipeline_mode<synchronous>, transform_indices = @transform_1, window_bounds = array<i64: 8, 1>}, {pipeline_mode = #tpu.pipeline_mode<synchronous>, transform_indices = @transform_2, window_bounds = array<i64: 8, 1>}, {transform_indices = @transform_3, window_bounds = array<i64: 1, 8, 128>}]} {
    %c0 = arith.constant 0 : index
    %c0_0 = arith.constant 0 : index
    %c0_1 = arith.constant 0 : index
    %0 = vector.load %arg1[%c0, %c0_0, %c0_1] : memref<1x8x128xf32, #tpu.memory_space<vmem>>, vector<1x8x128xf32>
    %1 = vector.shape_cast %0 : vector<1x8x128xf32> to vector<8x128xf32>
    %2 = vector.shape_cast %1 : vector<8x128xf32> to vector<1x8x128xf32>
    %cst = arith.constant dense<0.000000e+00> : vector<1xf32>
    %3 = vector.multi_reduction <add>, %2, %cst [1, 2] : vector<1x8x128xf32> to vector<1xf32>
    %4 = vector.shape_cast %3 : vector<1xf32> to vector<1x1x1xf32>
    %5 = vector.extract %4[0, 0, 0] : f32 from vector<1x1x1xf32>
    %6 = arith.mulf %1, %1 : vector<8x128xf32>
    %7 = vector.shape_cast %6 : vector<8x128xf32> to vector<1x8x128xf32>
    %cst_2 = arith.constant dense<0.000000e+00> : vector<1xf32>
    %8 = vector.multi_reduction <add>, %7, %cst_2 [1, 2] : vector<1x8x128xf32> to vector<1xf32>
    %9 = vector.shape_cast %8 : vector<1xf32> to vector<1x1x1xf32>
    %10 = vector.extract %9[0, 0, 0] : f32 from vector<1x1x1xf32>
    %cst_3 = arith.constant 9.765625E-4 : f32
    %11 = arith.mulf %5, %cst_3 : f32
    %12 = arith.mulf %5, %11 : f32
    %13 = arith.subf %10, %12 : f32
    %cst_4 = arith.constant 0.000000e+00 : f32
    %14 = arith.maximumf %13, %cst_4 : f32
    %cst_5 = arith.constant 9.77517105E-4 : f32
    %15 = arith.mulf %14, %cst_5 : f32
    %c0_6 = arith.constant 0 : index
    %c0_7 = arith.constant 0 : index
    %16 = vector.load %arg2[%c0_6, %c0_7] : memref<8x1xf32, #tpu.memory_space<vmem>>, vector<8x1xf32>
    %c0_8 = arith.constant 0 : index
    %c0_9 = arith.constant 0 : index
    %17 = vector.load %arg3[%c0_8, %c0_9] : memref<8x1xf32, #tpu.memory_space<vmem>>, vector<8x1xf32>
    %18 = vector.broadcast %15 : f32 to vector<8x1xf32>
    %cst_10 = arith.constant 9.99999996E-13 : f32
    %19 = vector.broadcast %cst_10 : f32 to vector<8x1xf32>
    %20 = arith.addf %18, %19 : vector<8x1xf32>
    %21 = math.rsqrt %20 : vector<8x1xf32>
    %22 = arith.mulf %16, %21 : vector<8x1xf32>
    %23 = vector.broadcast %11 : f32 to vector<8x1xf32>
    %24 = arith.mulf %23, %22 : vector<8x1xf32>
    %25 = arith.subf %17, %24 : vector<8x1xf32>
    %26 = vector.broadcast %22 : vector<8x1xf32> to vector<8x128xf32>
    %27 = arith.mulf %1, %26 : vector<8x128xf32>
    %28 = vector.broadcast %25 : vector<8x1xf32> to vector<8x128xf32>
    %29 = arith.addf %27, %28 : vector<8x128xf32>
    %c0_11 = arith.constant 0 : index
    %c0_12 = arith.constant 0 : index
    %c0_13 = arith.constant 0 : index
    %30 = vector.load %arg4[%c0_11, %c0_12, %c0_13] : memref<1x8x128xf32, #tpu.memory_space<vmem>>, vector<1x8x128xf32>
    %31 = vector.shape_cast %30 : vector<1x8x128xf32> to vector<8x128xf32>
    %32 = vector.shape_cast %29 : vector<8x128xf32> to vector<1x8x128xf32>
    tpu.vector_store %arg4[%c0_11, %c0_12, %c0_13], %32 {strides = array<i32>} : memref<1x8x128xf32, #tpu.memory_space<vmem>>, vector<1x8x128xf32>,
    return
  }
  func.func @transform_0(%arg0: i32) -> (i32, i32, i32) {
    %c0_i32 = arith.constant 0 : i32
    %c0_i32_0 = arith.constant 0 : i32
    %c0_i32_1 = arith.constant 0 : i32
    return %arg0, %c0_i32, %c0_i32_0 : i32, i32, i32
  }
  func.func @transform_1(%arg0: i32) -> (i32, i32) {
    %c0_i32 = arith.constant 0 : i32
    %c0_i32_0 = arith.constant 0 : i32
    %c0_i32_1 = arith.constant 0 : i32
    return %c0_i32, %c0_i32_0 : i32, i32
  }
  func.func @transform_2(%arg0: i32) -> (i32, i32) {
    %c0_i32 = arith.constant 0 : i32
    %c0_i32_0 = arith.constant 0 : i32
    %c0_i32_1 = arith.constant 0 : i32
    return %c0_i32, %c0_i32_0 : i32, i32
  }
  func.func @transform_3(%arg0: i32) -> (i32, i32, i32) {
    %c0_i32 = arith.constant 0 : i32
    %c0_i32_0 = arith.constant 0 : i32
    %c0_i32_1 = arith.constant 0 : i32
    return %arg0, %c0_i32, %c0_i32_0 : i32, i32, i32
  }
}

</mosaic_0001>

<llo_original>
// kernel: tpu_custom_call.1
$region0: #{tpu_custom_call.1}
  #allocation0 [shape = 'u32[]', space=smem, size = 0x4, offset = 0x4, fixed_abs, tag = 'smem constant byte address 0x4 - core index']
  #allocation1 [shape = 'u32[144,128]{1,0:T(1,128)}', space=vmem, size = 0x12000, scoped, tag = 'internal scratch']
  %s0 = inlined_call_operand.vmem [shape: f32[2,8,128], index: 0, kind: input, shape index: {}]
  %s1 = inlined_call_operand.vmem [shape: f32[8,1], index: 1, kind: input, shape index: {}]
  %s2 = inlined_call_operand.vmem [shape: f32[8,1], index: 2, kind: input, shape index: {}]
  %s3 = inlined_call_operand.hbm [shape: f32[2,8,128], index: 3, kind: output, shape index: {}]
  %s4 = sld [smem:[#allocation0]]
  $region45: #{tpu_custom_call.1} parent=0
    _
  %s6 = ssub.s32 1, %s4
  %s7 = scalar_select 0, %s6, %s4
  $region1: #{tpu_custom_call.1} parent=0
    #allocation2 [shape = 'u8[8192]{0}', space=vmem, size = 0x2000, scoped, tag = 'output window, operand 0']
    #allocation3 [shape = 's32[2]{0}', space=sflag, size = 0x8, scoped, tag = 'scoped memory for tpu_custom_call.1']
    %8 = vsyncpa [#allocation3], 0
    %s9 = scalar_lea.sflag [#allocation3], 1
    %10 = vsyncpa %s9, 0
    loop: start=0, step=1, limit=4
    $region2: #{tpu_custom_call.1} parent=1 // loop_pre_header
      _
    $region3: #{tpu_custom_call.1} parent=1 // loop_header
      %s12 = sphi 0, %s16
      %p13 = scmp.ge.s32.totalorder %s12, 4
      %s22 = sphi 0, %s24
      %s25 = sphi 0, %s22
      %s26 = sphi 0, %s25
      %s42 = sphi 0, %s26
      %s46 = sphi 0, %s46
      %s48 = sphi 0, %s46
      %s49 = sphi 0, %s48
      %s63 = sphi 0, %s49
      %s67 = sphi 0, %s67
      %s69 = sphi 0, %s67
      %s70 = sphi 0, %s69
      %s84 = sphi 0, %s70
      %s90 = sphi 0, %s92
      %s93 = sphi 0, %s90
      %s94 = sphi 0, %s93
      %s110 = sphi 0, %s94
    $region4: #{tpu_custom_call.1} parent=1 // loop_header_branch
      %15 = sbr.rel (%p13) target = $region8
    $region5: #{tpu_custom_call.1} parent=1 // loop_body
      %s17 = ssub.s32 %s12, 1
      %s18 = ssub.s32 %s12, 2
      %s19 = sadd.s32 %s12, 1
      %s20 = ssub.s32 %s12, %s19
      %p21 = scmp.eq.s32.totalorder %s20, 0
      %s23 = sadd.s32 %s22, 1
      %s24 = scalar_select %p21, %s22, %s23
      %p27 = pneg %p21
      %p28 = scmp.eq.s32.totalorder %s12, 1
      %p29 = por %p27, %p28
      %p30 = scmp.ne.s32.totalorder %s22, %s25
      %p31 = scmp.eq.s32.totalorder %s12, 0
      %p32 = por %p30, %p31
      %p33 = scmp.ne.s32.totalorder %s22, %s25
      %p34 = scmp.eq.s32.totalorder %s17, 1
      %p35 = por %p33, %p34
      %p36 = scmp.ne.s32.totalorder %s25, %s26
      %p37 = scmp.eq.s32.totalorder %s17, 0
      %p38 = por %p36, %p37
      %p39 = scmp.ne.s32.totalorder %s25, %s26
      %p40 = scmp.eq.s32.totalorder %s18, 1
      %p41 = por %p39, %p40
      %p43 = scmp.ne.s32.totalorder %s26, %s42
      %p44 = scmp.eq.s32.totalorder %s18, 0
      %p45 = por %p43, %p44
      %s47 = sadd.s32 %s46, 1
      %p50 = scmp.eq.s32.totalorder %s12, 1
      %p51 = scmp.ne.s32.totalorder %s46, %s48
      %p52 = scmp.eq.s32.totalorder %s12, 0
      %p53 = por %p51, %p52
      %p54 = scmp.ne.s32.totalorder %s46, %s48
      %p55 = scmp.eq.s32.totalorder %s17, 1
      %p56 = por %p54, %p55
      %p57 = scmp.ne.s32.totalorder %s48, %s49
      %p58 = scmp.eq.s32.totalorder %s17, 0
      %p59 = por %p57, %p58
      %p60 = scmp.ne.s32.totalorder %s48, %s49
      %p61 = scmp.eq.s32.totalorder %s18, 1
      %p62 = por %p60, %p61
      %p64 = scmp.ne.s32.totalorder %s49, %s63
      %p65 = scmp.eq.s32.totalorder %s18, 0
      %p66 = por %p64, %p65
      %s68 = sadd.s32 %s67, 1
      %p71 = scmp.eq.s32.totalorder %s12, 1
      %p72 = scmp.ne.s32.totalorder %s67, %s69
      %p73 = scmp.eq.s32.totalorder %s12, 0
      %p74 = por %p72, %p73
      %p75 = scmp.ne.s32.totalorder %s67, %s69
      %p76 = scmp.eq.s32.totalorder %s17, 1
      %p77 = por %p75, %p76
      %p78 = scmp.ne.s32.totalorder %s69, %s70
      %p79 = scmp.eq.s32.totalorder %s17, 0
      %p80 = por %p78, %p79
      %p81 = scmp.ne.s32.totalorder %s69, %s70
      %p82 = scmp.eq.s32.totalorder %s18, 1
      %p83 = por %p81, %p82
      %p85 = scmp.ne.s32.totalorder %s70, %s84
      %p86 = scmp.eq.s32.totalorder %s18, 0
      %p87 = por %p85, %p86
      %s88 = ssub.s32 %s12, %s19
      %p89 = scmp.eq.s32.totalorder %s88, 0
      %s91 = sadd.s32 %s90, 1
      %s92 = scalar_select %p89, %s90, %s91
      %p95 = pneg %p89
      %p96 = scmp.eq.s32.totalorder %s12, 1
      %p97 = por %p95, %p96
      %p98 = scmp.ne.s32.totalorder %s90, %s93
      %p99 = scmp.eq.s32.totalorder %s12, 0
      %p100 = por %p98, %p99
      %p101 = scmp.ne.s32.totalorder %s90, %s93
      %p102 = scmp.eq.s32.totalorder %s17, 1
      %p103 = por %p101, %p102
      %p104 = scmp.ne.s32.totalorder %s93, %s94
      %p105 = scmp.eq.s32.totalorder %s17, 0
      %p106 = por %p104, %p105
      %p107 = scmp.ne.s32.totalorder %s93, %s94
      %p108 = scmp.eq.s32.totalorder %s18, 1
      %p109 = por %p107, %p108
      %p111 = scmp.ne.s32.totalorder %s94, %s110
      %p112 = scmp.eq.s32.totalorder %s18, 0
      %p113 = por %p111, %p112
      %p114 = scmp.le.s32.totalorder 1, %s12
      %p115 = scmp.lt.s32.totalorder %s12, 3
      %p116 = pnand %p114, %p115
      %p117 = pneg %p116
      // Predicated region
      $region9: #{tpu_custom_call.1} parent=5 // pred_check
        _
      $region10: #{tpu_custom_call.1} parent=5 // pred_check_branch
        %119 = sbr.rel (%p116) target = $region12
      $region11: #{tpu_custom_call.1} parent=5 // pred_region
        %s120 = ssub.s32 %s12, 1
        // Predicated region
        $region13: #{tpu_custom_call.1} parent=11 // pred_check
          %p121 = pneg %p59
        $region14: #{tpu_custom_call.1} parent=11 // pred_check_branch
          %123 = sbr.rel (%p121) target = $region16
        $region15: #{tpu_custom_call.1} parent=11 // pred_region
          _
        $region16: #{tpu_custom_call.1} parent=11 // pred_fallthru
          _
        // Predicated region
        $region17: #{tpu_custom_call.1} parent=11 // pred_check
          %p124 = pneg %p80
        $region18: #{tpu_custom_call.1} parent=11 // pred_check_branch
          %126 = sbr.rel (%p124) target = $region20
        $region19: #{tpu_custom_call.1} parent=11 // pred_region
          _
        $region20: #{tpu_custom_call.1} parent=11 // pred_fallthru
          _
      $region12: #{tpu_custom_call.1} parent=5 // pred_fallthru
        _
      %p127 = scmp.lt.s32.totalorder %s12, 2
      // Predicated region
      $region21: #{tpu_custom_call.1} parent=5 // pred_check
        %p128 = pneg %p127
      $region22: #{tpu_custom_call.1} parent=5 // pred_check_branch
        %130 = sbr.rel (%p128) target = $region24
      $region23: #{tpu_custom_call.1} parent=5 // pred_region
        // Predicated region
        $region25: #{tpu_custom_call.1} parent=23 // pred_check
          %p131 = pneg %p32
        $region26: #{tpu_custom_call.1} parent=23 // pred_check_branch
          %133 = sbr.rel (%p131) target = $region28
        $region27: #{tpu_custom_call.1} parent=23 // pred_region
          %p134 = scmp.lt.s32.totalorder %s12, 1
          %s135 = scalar_select %p134, %s12, 1
          %s136 = smul.addr %s135, 8
          %s137 = scalar_lea.vmem %s0, %s136
        $region28: #{tpu_custom_call.1} parent=23 // pred_fallthru
          _
      $region24: #{tpu_custom_call.1} parent=5 // pred_fallthru
        _
      %p138 = scmp.le.s32.totalorder 1, %s12
      %p139 = scmp.lt.s32.totalorder %s12, 3
      %p140 = pnand %p138, %p139
      %p141 = pneg %p140
      // Predicated region
      $region29: #{tpu_custom_call.1} parent=5 // pred_check
        _
      $region30: #{tpu_custom_call.1} parent=5 // pred_check_branch
        %143 = sbr.rel (%p140) target = $region32
      $region31: #{tpu_custom_call.1} parent=5 // pred_region
        %s144 = ssub.s32 %s12, 1
        %p145 = scmp.lt.s32.totalorder %s17, 1
        %s146 = scalar_select %p145, %s17, 1
        %s147 = smul.addr %s146, 8
        %s148 = scalar_lea.vmem %s0, %s147
        %p149 = pneg %p38
        %p150 = pneg %p35
        %p151 = pneg %p59
        %p152 = pneg %p56
        %p153 = pneg %p80
        %p154 = pneg %p77
        %p155 = pneg %p106
        %p156 = pneg %p103
        %s157 = sand.u32 %s93, 1
        %s158 = scalar_lea.sflag [#allocation3], %s157
        %s159 = sand.u32 %s93, 1
        %s160 = smul.addr %s159, 8
        %s161 = scalar_lea.vmem [#allocation2], %s160
        %p162 = scmp.lt.s32.totalorder %s17, 1
        %s163 = scalar_select %p162, %s17, 1
        %s164 = smul.addr %s163, 8
        %s165 = scalar_lea.vmem %s0, %s164
        %v166 = vld [vmem:[%s165] sm:$0xff]
        %167 = vadd.xlane.f32.xlu0 %v166
        %v168 = vpop.xlane.xlu0 %167
        %v169 = vrot.slane %v168, 4
        %v170 = vadd.f32 %v168, %v169
        %v171 = vrot.slane %v170, 2
        %v172 = vadd.f32 %v170, %v171
        %v173 = vrot.slane %v172, 1
        %v174 = vadd.f32 %v172, %v173
        %s175 = vtos %v174
        %v176 = vmul.f32 %v166, %v166
        %177 = vadd.xlane.f32.xlu0 %v176
        %v178 = vpop.xlane.xlu0 %177
        %v179 = vrot.slane %v178, 4
        %v180 = vadd.f32 %v178, %v179
        %v181 = vrot.slane %v180, 2
        %v182 = vadd.f32 %v180, %v181
        %v183 = vrot.slane %v182, 1
        %v184 = vadd.f32 %v182, %v183
        %s185 = vtos %v184
        %s186 = smul.f32 %s175, 0.0009765625
        %s187 = smul.f32 %s175, %s186
        %s188 = ssub.f32 %s185, %s187
        %s189 = smax.f32 %s188, 0.0
        %s190 = smul.f32 %s189, 0.0009775171
        %v191 = vld [vmem:[%s1] sm:$0xff]
        %v192 = vld [vmem:[%s2] sm:$0xff]
        %v193 = vstv %s190
        %v194 = vadd.f32 %v193, 1e-12
        %v195 = vrsqrt.pop %v194
        %v196 = vmul.f32 %v191, %v195
        %v197 = vstv %s186
        %v198 = vmul.f32 %v197, %v196
        %v199 = vsub.f32 %v192, %v198
        %201 = vset.pattern.permute.xlu0 0
        %202 = vperm.xlu0 %201, %v196
        %v203 = vpop.permute.xlu0 %202
        %v205 = vmul.f32 %v166, %v203
        %207 = vset.pattern.permute.xlu0 0
        %208 = vperm.xlu0 %207, %v199
        %v209 = vpop.permute.xlu0 %208
        %v211 = vadd.f32 %v205, %v209
        %212 = vst [vmem:[%s161] sm:$0xff] %v211
        %s213 = sand.u32 %s93, 1
        %s214 = scalar_lea.sflag [#allocation3], %s213
        %s215 = sand.u32 %s93, 1
        %s216 = smul.addr %s215, 8
        %s217 = scalar_lea.vmem [#allocation2], %s216
        // Predicated region
        $region33: #{tpu_custom_call.1} parent=31 // pred_check
          %p218 = pneg %p103
        $region34: #{tpu_custom_call.1} parent=31 // pred_check_branch
          %220 = sbr.rel (%p218) target = $region36
        $region35: #{tpu_custom_call.1} parent=31 // pred_region
          %s222 = ssub.s32 128, 128
          %223 = vsyncadd %s214, %s222
          %s224 = smul.addr %s17, 128
          %s225 = scalar_lea.hbm %s3, %s224
          %s227 = sshll.u32 %s217, 4
          %s228 = int_to_ptr.vmem [resolvable:$true] %s227
          %230 = dma.vmem_to_hbm [thread:$0]  %s228, 128, %s225, %s214
        $region36: #{tpu_custom_call.1} parent=31 // pred_fallthru
          _
      $region32: #{tpu_custom_call.1} parent=5 // pred_fallthru
        _
      %p231 = scmp.le.s32.totalorder 2, %s12
      // Predicated region
      $region37: #{tpu_custom_call.1} parent=5 // pred_check
        %p232 = pneg %p231
      $region38: #{tpu_custom_call.1} parent=5 // pred_check_branch
        %234 = sbr.rel (%p232) target = $region40
      $region39: #{tpu_custom_call.1} parent=5 // pred_region
        %s235 = ssub.s32 %s12, 2
        // Predicated region
        $region41: #{tpu_custom_call.1} parent=39 // pred_check
          %p236 = pneg %p109
        $region42: #{tpu_custom_call.1} parent=39 // pred_check_branch
          %238 = sbr.rel (%p236) target = $region44
        $region43: #{tpu_custom_call.1} parent=39 // pred_region
          %s239 = sand.u32 %s94, 1
          %s240 = scalar_lea.sflag [#allocation3], %s239
          %s241 = sand.u32 %s94, 1
          %s242 = smul.addr %s241, 8
          %s243 = scalar_lea.vmem [#allocation2], %s242
          %244 = dma.done %s240, 128
        $region44: #{tpu_custom_call.1} parent=39 // pred_fallthru
          _
      $region40: #{tpu_custom_call.1} parent=5 // pred_fallthru
        _
    $region6: #{tpu_custom_call.1} parent=1 // loop_footer
      %s16 = sadd.s32 1, %s12
    $region7: #{tpu_custom_call.1} parent=1 // loop_footer_branch
      %11 = sbr.rel target = $region3
    $region8: #{tpu_custom_call.1} parent=1 // loop_exit
      _
    %245 = vsyncpa [#allocation3], 1
    %s246 = scalar_lea.sflag [#allocation3], 1
    %247 = vsyncpa %s246, 1

</llo_original>
